<compile_context>
chip_gen: v6e
topology: v6e:2x2x1
jax: 0.10.0
libtpu: 0.0.40
codegen_flags: <defaults>
</compile_context>

<pallas_src>
import jax
import jax.numpy as jnp
from jax.experimental import pallas as pl
from jax.experimental.pallas import tpu as pltpu


# Conservative VMEM planning constants (valid across v5e / v6e / v7x).
_VMEM_PLAN_BUDGET = 40 * 1024 * 1024   # bytes assumed usable when sizing tiles
_VMEM_LIMIT_BYTES = 48 * 1024 * 1024   # scoped-VMEM limit requested from Mosaic


def _round_up(n, m):
    return ((n + m - 1) // m) * m


def shared_latent_kernel(x_ref, w1_ref, b1_ref, w2_ref, b2_ref,
                         latent_ref, recon_ref):
    """Fused fc1 -> fc2 on one batch tile.

    x_ref : (TB, D)    w1_ref: (D, L)    b1_ref: (1, L)
    w2_ref: (L, D)     b2_ref: (1, D)
    latent_ref: (TB, L)   recon_ref: (TB, D)

    Weights arrive already transposed to (K, N) layout, so both matmuls are
    straight MXU contractions of the last LHS axis with the first RHS axis.
    """
    # fc1: latent = x @ W1.T + b1
    latent_f32 = jnp.dot(x_ref[...], w1_ref[...],
                         preferred_element_type=jnp.float32)
    latent_f32 = latent_f32 + b1_ref[...]                 # (TB, L) + (1, L)
    latent_ref[...] = latent_f32.astype(latent_ref.dtype)

    # fc2: recon = latent @ W2.T + b2 — latent stays on-chip (no HBM trip).
    lhs = latent_f32.astype(w2_ref.dtype)                 # no-op for f32 weights
    recon_f32 = jnp.dot(lhs, w2_ref[...],
                        preferred_element_type=jnp.float32)
    recon_ref[...] = (recon_f32 + b2_ref[...]).astype(recon_ref.dtype)


def shared_latent_layer(x, w1, b1, w2, b2, *, matmul_dtype=None,
                        single_block_max_batch=256):
    """Pallas forward of SharedLatentLayer.

    Args:
      x : (B, input_dim)
      w1: (latent_dim, input_dim)   -- PyTorch fc1.weight layout
      b1: (latent_dim,)
      w2: (input_dim, latent_dim)   -- PyTorch fc2.weight layout
      b2: (input_dim,)
      matmul_dtype: optional lower-precision operand dtype (e.g. jnp.bfloat16)
        for large dims on v6e/v7x; accumulation and bias add stay f32.
    Returns:
      (latent (B, latent_dim), recon_x (B, input_dim))
    """
    B, D = x.shape
    L = w1.shape[0]
    out_dtype = x.dtype

    # One-time wrapper-side prep on the tiny weight arrays: transpose into
    # (K, N) layout and (optionally) cast operands to bf16 in the same copy.
    w1t = jnp.transpose(w1)                       # (D, L)
    w2t = jnp.transpose(w2)                       # (L, D)
    b1r = b1.reshape(1, L).astype(jnp.float32)    # bias stays f32
    b2r = b2.reshape(1, D).astype(jnp.float32)
    if matmul_dtype is not None:
        x_in = x.astype(matmul_dtype)
        w1t = w1t.astype(matmul_dtype)
        w2t = w2t.astype(matmul_dtype)
    else:
        x_in = x

    xb = x_in.dtype.itemsize
    wb = w1t.dtype.itemsize
    ob = jnp.dtype(out_dtype).itemsize
    weight_bytes = 2 * D * L * wb + (L + D) * 4

    # --- Small-batch fast path: whole problem resident in VMEM, no grid. ---
    whole_bytes = B * D * xb + B * L * ob + B * D * ob + weight_bytes
    if B <= single_block_max_batch and whole_bytes <= _VMEM_PLAN_BUDGET:
        latent, recon = pl.pallas_call(
            shared_latent_kernel,
            out_shape=(
                jax.ShapeDtypeStruct((B, L), out_dtype),
                jax.ShapeDtypeStruct((B, D), out_dtype),
            ),
            in_specs=[
                pl.BlockSpec(memory_space=pltpu.MemorySpace.VMEM),  # x
                pl.BlockSpec(memory_space=pltpu.MemorySpace.VMEM),  # w1t
                pl.BlockSpec(memory_space=pltpu.MemorySpace.VMEM),  # b1
                pl.BlockSpec(memory_space=pltpu.MemorySpace.VMEM),  # w2t
                pl.BlockSpec(memory_space=pltpu.MemorySpace.VMEM),  # b2
            ],
            out_specs=(
                pl.BlockSpec(memory_space=pltpu.MemorySpace.VMEM),
                pl.BlockSpec(memory_space=pltpu.MemorySpace.VMEM),
            ),
            compiler_params=pltpu.CompilerParams(
                vmem_limit_bytes=_VMEM_LIMIT_BYTES),
        )(x_in, w1t, b1r, w2t, b2r)
        return latent, recon

    # --- Grid path: tile the batch axis, weights VMEM-resident. ---
    # Per-batch-row VMEM: double-buffered x tile + double-buffered outputs.
    per_row = 2 * D * xb + 2 * L * ob + 2 * D * ob
    tb_max = (_VMEM_PLAN_BUDGET - weight_bytes) // max(per_row, 1)
    tb_max = max(8, min((int(tb_max) // 8) * 8, 2048))
    # >= 2 tiles so both TensorCores on v7x get work; pick TB from B so the
    # batch padding is at most a few rows (not up to a fixed block size).
    n_tiles = max(2, pl.cdiv(B, tb_max))
    TB = _round_up(pl.cdiv(B, n_tiles), 8)
    Bp = TB * n_tiles

    if Bp != B:
        x_in = jnp.pad(x_in, ((0, Bp - B), (0, 0)))

    latent, recon = pl.pallas_call(
        shared_latent_kernel,
        out_shape=(
            jax.ShapeDtypeStruct((Bp, L), out_dtype),
            jax.ShapeDtypeStruct((Bp, D), out_dtype),
        ),
        grid=(n_tiles,),
        in_specs=[
            pl.BlockSpec((TB, D), lambda i: (i, 0)),                # x tile
            pl.BlockSpec((D, L), lambda i: (0, 0),
                         pipeline_mode=pl.Buffered(1)),             # w1t (resident)
            pl.BlockSpec((1, L), lambda i: (0, 0),
                         pipeline_mode=pl.Buffered(1)),             # b1  (resident)
            pl.BlockSpec((L, D), lambda i: (0, 0),
                         pipeline_mode=pl.Buffered(1)),             # w2t (resident)
            pl.BlockSpec((1, D), lambda i: (0, 0),
                         pipeline_mode=pl.Buffered(1)),             # b2  (resident)
        ],
        out_specs=(
            pl.BlockSpec((TB, L), lambda i: (i, 0)),
            pl.BlockSpec((TB, D), lambda i: (i, 0)),
        ),
        compiler_params=pltpu.CompilerParams(
            dimension_semantics=("parallel",),
            vmem_limit_bytes=_VMEM_LIMIT_BYTES),
    )(x_in, w1t, b1r, w2t, b2r)

    if Bp != B:
        latent = latent[:B]
        recon = recon[:B]
    return latent, recon


def _reference(x, w1, b1, w2, b2):
    latent = x @ w1.T + b1
    recon = latent @ w2.T + b2
    return latent, recon


if __name__ == "__main__":
    key = jax.random.PRNGKey(0)
    k_x, k_w1, k_b1, k_w2, k_b2 = jax.random.split(key, 5)

    batch = 8
    input_dim = 32
    latent_dim = 16

    x = jax.random.normal(k_x, (batch, input_dim), dtype=jnp.float32)

    # Deterministic parameter init (uniform, roughly matching torch Linear scale).
    bound1 = 1.0 / (input_dim ** 0.5)
    bound2 = 1.0 / (latent_dim ** 0.5)
    w1 = jax.random.uniform(k_w1, (latent_dim, input_dim), jnp.float32,
                            -bound1, bound1)
    b1 = jax.random.uniform(k_b1, (latent_dim,), jnp.float32, -bound1, bound1)
    w2 = jax.random.uniform(k_w2, (input_dim, latent_dim), jnp.float32,
                            -bound2, bound2)
    b2 = jax.random.uniform(k_b2, (input_dim,), jnp.float32, -bound2, bound2)

    latent, recon = shared_latent_layer(x, w1, b1, w2, b2)
    jax.block_until_ready((latent, recon))

    ref_latent, ref_recon = _reference(x, w1, b1, w2, b2)
    assert latent.shape == (batch, latent_dim)
    assert recon.shape == (batch, input_dim)
    assert jnp.allclose(latent, ref_latent, atol=1e-5, rtol=1e-5)
    assert jnp.allclose(recon, ref_recon, atol=1e-5, rtol=1e-5)

    print("KERNEL_OK")
</pallas_src>

<mosaic_0001>
module attributes {stable_mosaic.version = 11 : i64} {
  func.func @shared_latent_kernel(%arg0: memref<8x32xf32, #tpu.memory_space<vmem>>, %arg1: memref<32x16xf32, #tpu.memory_space<vmem>>, %arg2: memref<1x16xf32, #tpu.memory_space<vmem>>, %arg3: memref<16x32xf32, #tpu.memory_space<vmem>>, %arg4: memref<1x32xf32, #tpu.memory_space<vmem>>, %arg5: memref<8x16xf32, #tpu.memory_space<vmem>>, %arg6: memref<8x32xf32, #tpu.memory_space<vmem>>) attributes {dimension_semantics = [], scalar_prefetch = 0 : i64, scratch_operands = 0 : i64, tpu.core_type = #tpu.core_type<tc>} {
    %c0 = arith.constant 0 : index
    %c0_0 = arith.constant 0 : index
    %0 = vector.load %arg0[%c0, %c0_0] : memref<8x32xf32, #tpu.memory_space<vmem>>, vector<8x32xf32>
    %c0_1 = arith.constant 0 : index
    %c0_2 = arith.constant 0 : index
    %1 = vector.load %arg1[%c0_1, %c0_2] : memref<32x16xf32, #tpu.memory_space<vmem>>, vector<32x16xf32>
    %cst = arith.constant dense<0.000000e+00> : vector<8x16xf32>
    %2 = tpu.matmul %0, %1, %cst {dimension_numbers = #tpu.dot_dimension_numbers<[1], [0], [0], [1], [0, 0, 1, 1], [], []>} : vector<8x32xf32>, vector<32x16xf32>, vector<8x16xf32> -> vector<8x16xf32>
    %c0_3 = arith.constant 0 : index
    %c0_4 = arith.constant 0 : index
    %3 = vector.load %arg2[%c0_3, %c0_4] : memref<1x16xf32, #tpu.memory_space<vmem>>, vector<1x16xf32>
    %4 = vector.broadcast %3 : vector<1x16xf32> to vector<8x16xf32>
    %5 = arith.addf %2, %4 : vector<8x16xf32>
    %c0_5 = arith.constant 0 : index
    %c0_6 = arith.constant 0 : index
    %6 = vector.load %arg5[%c0_5, %c0_6] : memref<8x16xf32, #tpu.memory_space<vmem>>, vector<8x16xf32>
    tpu.vector_store %arg5[%c0_5, %c0_6], %5 {strides = array<i32>} : memref<8x16xf32, #tpu.memory_space<vmem>>, vector<8x16xf32>,
    %c0_7 = arith.constant 0 : index
    %c0_8 = arith.constant 0 : index
    %7 = vector.load %arg3[%c0_7, %c0_8] : memref<16x32xf32, #tpu.memory_space<vmem>>, vector<16x32xf32>
    %cst_9 = arith.constant dense<0.000000e+00> : vector<8x32xf32>
    %8 = tpu.matmul %5, %7, %cst_9 {dimension_numbers = #tpu.dot_dimension_numbers<[1], [0], [0], [1], [0, 0, 1, 1], [], []>} : vector<8x16xf32>, vector<16x32xf32>, vector<8x32xf32> -> vector<8x32xf32>
    %c0_10 = arith.constant 0 : index
    %c0_11 = arith.constant 0 : index
    %9 = vector.load %arg4[%c0_10, %c0_11] : memref<1x32xf32, #tpu.memory_space<vmem>>, vector<1x32xf32>
    %10 = vector.broadcast %9 : vector<1x32xf32> to vector<8x32xf32>
    %11 = arith.addf %8, %10 : vector<8x32xf32>
    %c0_12 = arith.constant 0 : index
    %c0_13 = arith.constant 0 : index
    %12 = vector.load %arg6[%c0_12, %c0_13] : memref<8x32xf32, #tpu.memory_space<vmem>>, vector<8x32xf32>
    tpu.vector_store %arg6[%c0_12, %c0_13], %11 {strides = array<i32>} : memref<8x32xf32, #tpu.memory_space<vmem>>, vector<8x32xf32>,
    return
  }
}

</mosaic_0001>

<llo_original>
// kernel: tpu_custom_call.1
$region0: #{tpu_custom_call.1}
  #allocation0 [shape = 'u32[]', space=smem, size = 0x4, offset = 0x4, fixed_abs, tag = 'smem constant byte address 0x4 - core index']
  #allocation1 [shape = 'u32[144,128]{1,0:T(1,128)}', space=vmem, size = 0x12000, scoped, tag = 'internal scratch']
  %s0 = inlined_call_operand.vmem [shape: f32[8,32], index: 0, kind: input, shape index: {}]
  %s1 = inlined_call_operand.vmem [shape: f32[32,16], index: 1, kind: input, shape index: {}]
  %s2 = inlined_call_operand.vmem [shape: f32[1,16], index: 2, kind: input, shape index: {}]
  %s3 = inlined_call_operand.vmem [shape: f32[16,32], index: 3, kind: input, shape index: {}]
  %s4 = inlined_call_operand.vmem [shape: f32[1,32], index: 4, kind: input, shape index: {}]
  %s5 = inlined_call_operand.hbm [shape: f32[8,16], index: 5, kind: output, shape index: {0}]
  %s6 = inlined_call_operand.hbm [shape: f32[8,32], index: 6, kind: output, shape index: {1}]
  %7 = xla_tuple %s5, %s6
  %s8 = sld [smem:[#allocation0]]
  $region38: #{tpu_custom_call.1} parent=0
    _
  %s10 = ssub.s32 1, %s8
  %s11 = scalar_select 0, %s10, %s8
  $region1: #{tpu_custom_call.1} parent=0
    #allocation2 [shape = 'u8[4096]{0}', space=vmem, size = 0x1000, scoped, tag = 'output window, operand 0, single buffered']
    #allocation3 [shape = 's32[1]{0}', space=sflag, size = 0x4, scoped, tag = 'scoped memory for tpu_custom_call.1']
    #allocation4 [shape = 'u8[4096]{0}', space=vmem, size = 0x1000, scoped, tag = 'output window, operand 1, single buffered']
    #allocation5 [shape = 's32[1]{0}', space=sflag, size = 0x4, scoped, tag = 'scoped memory for tpu_custom_call.1']
    %12 = vsyncpa [#allocation3], 0
    %13 = vsyncpa [#allocation5], 0
    // Predicated region
    $region2: #{tpu_custom_call.1} parent=1 // pred_check
      _
    $region3: #{tpu_custom_call.1} parent=1 // pred_check_branch
      %15 = sbr.rel (0) target = $region5
    $region4: #{tpu_custom_call.1} parent=1 // pred_region
      _
    $region5: #{tpu_custom_call.1} parent=1 // pred_fallthru
      _
    // Predicated region
    $region6: #{tpu_custom_call.1} parent=1 // pred_check
      _
    $region7: #{tpu_custom_call.1} parent=1 // pred_check_branch
      %17 = sbr.rel (0) target = $region9
    $region8: #{tpu_custom_call.1} parent=1 // pred_region
      _
    $region9: #{tpu_custom_call.1} parent=1 // pred_fallthru
      _
    // Predicated region
    $region10: #{tpu_custom_call.1} parent=1 // pred_check
      _
    $region11: #{tpu_custom_call.1} parent=1 // pred_check_branch
      %19 = sbr.rel (0) target = $region13
    $region12: #{tpu_custom_call.1} parent=1 // pred_region
      _
    $region13: #{tpu_custom_call.1} parent=1 // pred_fallthru
      _
    // Predicated region
    $region14: #{tpu_custom_call.1} parent=1 // pred_check
      _
    $region15: #{tpu_custom_call.1} parent=1 // pred_check_branch
      %21 = sbr.rel (0) target = $region17
    $region16: #{tpu_custom_call.1} parent=1 // pred_region
      _
    $region17: #{tpu_custom_call.1} parent=1 // pred_fallthru
      _
    // Predicated region
    $region18: #{tpu_custom_call.1} parent=1 // pred_check
      _
    $region19: #{tpu_custom_call.1} parent=1 // pred_check_branch
      %23 = sbr.rel (0) target = $region21
    $region20: #{tpu_custom_call.1} parent=1 // pred_region
      _
    $region21: #{tpu_custom_call.1} parent=1 // pred_fallthru
      _
    %v24 = vld [vmem:[%s0] sm:$0xff]
    %v25 = vld [vmem:[%s1] sm:$0xff]
    %v26 = vld [vmem:[%s1 + $0x8] sm:$0xff]
    %v27 = vld [vmem:[%s1 + $0x10] sm:$0xff]
    %v28 = vld [vmem:[%s1 + $0x18] sm:$0xff]
    %v29 = vld [vmem:[%s2] sm:$0x1]
    %v31 = vlaneseq
    %v32 = vshrl.u32 %v31, 7
    %v33 = vsub.s32 0, %v32
    %v34 = vrot.slane %v29, %v33
    %vm36 = vcmask 261120
    %v38 = vsel %vm36, %v24, 0
    %40 = vmatprep.subr.mxu0 0.0
    %41 = vmatpush1.msra.mxu0 0.0
    %42 = vmatprep.subr.mxu0 0.0
    %43 = vmatpush1.msra.mxu0 0.0
    %44 = vmatprep.subr.mxu0 0.0
    %45 = vmatpush1.msra.mxu0 0.0
    %46 = vmatprep.subr.mxu0 0.0
    %47 = vmatpush1.msra.mxu0 0.0
    %48 = vmatprep.subr.mxu0 0.0
    %49 = vmatpush1.msra.mxu0 0.0
    %50 = vmatprep.subr.mxu0 0.0
    %51 = vmatpush1.msra.mxu0 0.0
    %52 = vmatprep.subr.mxu0 0.0
    %53 = vmatpush1.msra.mxu0 0.0
    %54 = vmatprep.subr.mxu0 0.0
    %55 = vmatpush1.msra.mxu0 0.0
    %56 = vmatprep.subr.mxu0 0.0
    %57 = vmatpush1.msra.mxu0 0.0
    %58 = vmatprep.subr.mxu0 0.0
    %59 = vmatpush1.msra.mxu0 0.0
    %60 = vmatprep.subr.mxu0 0.0
    %61 = vmatpush1.msra.mxu0 0.0
    %62 = vmatprep.subr.mxu0 0.0
    %63 = vmatpush1.msra.mxu0 0.0
    %64 = vmatprep.subr.mxu0 0.0
    %65 = vmatpush1.msra.mxu0 %v28
    %66 = vmatprep.subr.mxu0 0.0
    %67 = vmatpush1.msra.mxu0 %v27
    %68 = vmatprep.subr.mxu0 0.0
    %69 = vmatpush1.msra.mxu0 %v26
    %70 = vmatprep.subr.mxu0 0.0
    %71 = vmatpush1.msra.mxu0 %v25
    %72 = vmatprep.subr.mxu0 0.0
    %73 = vmatpush2.msra.mxu0 0.0
    %74 = vmatprep.subr.mxu0 0.0
    %75 = vmatpush2.msra.mxu0 0.0
    %76 = vmatprep.subr.mxu0 0.0
    %77 = vmatpush2.msra.mxu0 0.0
    %78 = vmatprep.subr.mxu0 0.0
    %79 = vmatpush2.msra.mxu0 0.0
    %80 = vmatprep.subr.mxu0 0.0
    %81 = vmatpush2.msra.mxu0 0.0
    %82 = vmatprep.subr.mxu0 0.0
    %83 = vmatpush2.msra.mxu0 0.0
    %84 = vmatprep.subr.mxu0 0.0
    %85 = vmatpush2.msra.mxu0 0.0
    %86 = vmatprep.subr.mxu0 0.0
    %87 = vmatpush2.msra.mxu0 0.0
    %88 = vmatprep.subr.mxu0 0.0
    %89 = vmatpush2.msra.mxu0 0.0
    %90 = vmatprep.subr.mxu0 0.0
    %91 = vmatpush2.msra.mxu0 0.0
    %92 = vmatprep.subr.mxu0 0.0
    %93 = vmatpush2.msra.mxu0 0.0
    %94 = vmatprep.subr.mxu0 0.0
    %95 = vmatpush2.msra.mxu0 0.0
    %96 = vmatprep.subr.mxu0 0.0
    %97 = vmatpush2.msra.mxu0 0.0
    %98 = vmatprep.subr.mxu0 0.0
    %99 = vmatpush2.msra.mxu0 0.0
    %100 = vmatprep.subr.mxu0 0.0
    %101 = vmatpush2.msra.mxu0 0.0
    %102 = vmatprep.subr.mxu0 0.0
    %103 = vmatpush2.msra.mxu0 0.0
    %104 = vmatprep.mubr.f32.mxu0 0.0
    %105 = vmatmul.mubr.f32.gmra.mxu0 %v38
    %v106 = vpop.f32.mrf.mxu0
    %v107 = vadd.f32 %v34, %v106
    %v108 = vpop.f32.mrf.mxu0
    %109 = vdwg.mxu0
    %vm110 = vcmask 130048
    %111 = vst.msk [vmem:[#allocation2] sm:$0xff] %vm110, %v107
    %v112 = vld [vmem:[%s3] sm:$0xff]
    %v113 = vld [vmem:[%s3 + $0x8] sm:$0xff]
    %v114 = vld [vmem:[%s4] sm:$0x1]
    %v116 = vlaneseq
    %v117 = vshrl.u32 %v116, 7
    %v118 = vsub.s32 0, %v117
    %v119 = vrot.slane %v114, %v118
    %v122 = vsel %vm110, %v107, 0
    %124 = vmatprep.subr.mxu0 0.0
    %125 = vmatpush1.msra.mxu0 0.0
    %126 = vmatprep.subr.mxu0 0.0
    %127 = vmatpush1.msra.mxu0 0.0
    %128 = vmatprep.subr.mxu0 0.0
    %129 = vmatpush1.msra.mxu0 0.0
    %130 = vmatprep.subr.mxu0 0.0
    %131 = vmatpush1.msra.mxu0 0.0
    %132 = vmatprep.subr.mxu0 0.0
    %133 = vmatpush1.msra.mxu0 0.0
    %134 = vmatprep.subr.mxu0 0.0
    %135 = vmatpush1.msra.mxu0 0.0
    %136 = vmatprep.subr.mxu0 0.0
    %137 = vmatpush1.msra.mxu0 0.0
    %138 = vmatprep.subr.mxu0 0.0
    %139 = vmatpush1.msra.mxu0 0.0
    %140 = vmatprep.subr.mxu0 0.0
    %141 = vmatpush1.msra.mxu0 0.0
    %142 = vmatprep.subr.mxu0 0.0
    %143 = vmatpush1.msra.mxu0 0.0
    %144 = vmatprep.subr.mxu0 0.0
    %145 = vmatpush1.msra.mxu0 0.0
    %146 = vmatprep.subr.mxu0 0.0
    %147 = vmatpush1.msra.mxu0 0.0
    %148 = vmatprep.subr.mxu0 0.0
    %149 = vmatpush1.msra.mxu0 0.0
    %150 = vmatprep.subr.mxu0 0.0
    %151 = vmatpush1.msra.mxu0 0.0
    %152 = vmatprep.subr.mxu0 0.0
    %153 = vmatpush1.msra.mxu0 %v113
    %154 = vmatprep.subr.mxu0 0.0
    %155 = vmatpush1.msra.mxu0 %v112
    %156 = vmatprep.subr.mxu0 0.0
    %157 = vmatpush2.msra.mxu0 0.0
    %158 = vmatprep.subr.mxu0 0.0
    %159 = vmatpush2.msra.mxu0 0.0
    %160 = vmatprep.subr.mxu0 0.0
    %161 = vmatpush2.msra.mxu0 0.0
    %162 = vmatprep.subr.mxu0 0.0
    %163 = vmatpush2.msra.mxu0 0.0
    %164 = vmatprep.subr.mxu0 0.0
    %165 = vmatpush2.msra.mxu0 0.0
    %166 = vmatprep.subr.mxu0 0.0
    %167 = vmatpush2.msra.mxu0 0.0
    %168 = vmatprep.subr.mxu0 0.0
    %169 = vmatpush2.msra.mxu0 0.0
    %170 = vmatprep.subr.mxu0 0.0
    %171 = vmatpush2.msra.mxu0 0.0
    %172 = vmatprep.subr.mxu0 0.0
    %173 = vmatpush2.msra.mxu0 0.0
    %174 = vmatprep.subr.mxu0 0.0
    %175 = vmatpush2.msra.mxu0 0.0
    %176 = vmatprep.subr.mxu0 0.0
    %177 = vmatpush2.msra.mxu0 0.0
    %178 = vmatprep.subr.mxu0 0.0
    %179 = vmatpush2.msra.mxu0 0.0
    %180 = vmatprep.subr.mxu0 0.0
    %181 = vmatpush2.msra.mxu0 0.0
    %182 = vmatprep.subr.mxu0 0.0
    %183 = vmatpush2.msra.mxu0 0.0
    %184 = vmatprep.subr.mxu0 0.0
    %185 = vmatpush2.msra.mxu0 0.0
    %186 = vmatprep.subr.mxu0 0.0
    %187 = vmatpush2.msra.mxu0 0.0
    %188 = vmatprep.mubr.f32.mxu0 0.0
    %189 = vmatmul.mubr.f32.gmra.mxu0 %v122
    %v190 = vpop.f32.mrf.mxu0
    %v191 = vadd.f32 %v119, %v190
    %v192 = vpop.f32.mrf.mxu0
    %193 = vdwg.mxu0
    %194 = vst.msk [vmem:[#allocation4] sm:$0xff] %vm36, %v191
    // Predicated region
    $region22: #{tpu_custom_call.1} parent=1 // pred_check
      _
    $region23: #{tpu_custom_call.1} parent=1 // pred_check_branch
      %196 = sbr.rel (0) target = $region25
    $region24: #{tpu_custom_call.1} parent=1 // pred_region
      %s198 = ssub.s32 128, 128
      %199 = vsyncadd [#allocation3], %s198
      %s201 = sshll.u32 [#allocation2], 4
      %s202 = int_to_ptr.vmem [resolvable:$true] %s201
      %204 = dma.vmem_to_hbm [thread:$0]  %s202, 128, %s5, [#allocation3]
    $region25: #{tpu_custom_call.1} parent=1 // pred_fallthru
      _
    // Predicated region
    $region26: #{tpu_custom_call.1} parent=1 // pred_check
      _
    $region27: #{tpu_custom_call.1} parent=1 // pred_check_branch
      %206 = sbr.rel (0) target = $region29
    $region28: #{tpu_custom_call.1} parent=1 // pred_region
      %s208 = ssub.s32 128, 128
      %209 = vsyncadd [#allocation5], %s208
      %s211 = sshll.u32 [#allocation4], 4
      %s212 = int_to_ptr.vmem [resolvable:$true] %s211
      %214 = dma.vmem_to_hbm [thread:$0]  %s212, 128, %s6, [#allocation5]
    $region29: #{tpu_custom_call.1} parent=1 // pred_fallthru
      _
    // Predicated region
    $region30: #{tpu_custom_call.1} parent=1 // pred_check
      _
    $region31: #{tpu_custom_call.1} parent=1 // pred_check_branch
      %216 = sbr.rel (0) target = $region33
    $region32: #{tpu_custom_call.1} parent=1 // pred_region
      %217 = dma.done [#allocation3], 128
    $region33: #{tpu_custom_call.1} parent=1 // pred_fallthru
      _
    // Predicated region
    $region34: #{tpu_custom_call.1} parent=1 // pred_check
      _
    $region35: #{tpu_custom_call.1} parent=1 // pred_check_branch
      %219 = sbr.rel (0) target = $region37
    $region36: #{tpu_custom_call.1} parent=1 // pred_region
      %220 = dma.done [#allocation5], 128
    $region37: #{tpu_custom_call.1} parent=1 // pred_fallthru
      _
    %221 = vsyncpa [#allocation3], 1
    %222 = vsyncpa [#allocation5], 1

</llo_original>
